<compile_context>
chip_gen: v5e
topology: v5e:2x2
jax: 0.10.0
libtpu: 0.0.40
codegen_flags: <defaults>
</compile_context>

<pallas_src>
import jax
import jax.numpy as jnp
from jax import lax
from jax.experimental import pallas as pl
from jax.experimental.pallas import tpu as pltpu

LANES = 128
SUBLANES = 8


def _round_up(x, k):
    return ((x + k - 1) // k) * k


def focal_loss(pred, gt, *, tile_rows=2048, strip_rows=64, unroll=4):
    """CornerNet focal loss (forward) with a Pallas TPU reduction kernel.

    pred, gt: same-shape float arrays (pred values in (0, 1)).
    Returns a scalar float32 loss.
    """
    assert pred.shape == gt.shape
    n = pred.size

    # ---- lane-dense (m, 128) view; zero-copy when n % 128 == 0 -------------
    pred_flat = pred.reshape(-1)
    gt_flat = gt.reshape(-1)
    pad = (-n) % LANES
    if pad:
        # Ragged-lane fallback: pad the last row with neutral values
        # (pred=0.5 -> finite log, gt=2.0 -> neither pos nor neg).
        # TODO(synk): for very large non-128-multiple inputs this is an extra
        # HBM copy; a flat-1D BlockSpec + in-kernel lane mask would avoid it.
        pred_flat = jnp.concatenate(
            [pred_flat, jnp.full((pad,), 0.5, pred_flat.dtype)])
        gt_flat = jnp.concatenate(
            [gt_flat, jnp.full((pad,), 2.0, gt_flat.dtype)])
    m = (n + pad) // LANES                      # valid rows
    pred2d = pred_flat.reshape(m, LANES)
    gt2d = gt_flat.reshape(m, LANES)

    # ---- tile / strip sizing ------------------------------------------------
    if m >= tile_rows:
        tile_rows = _round_up(tile_rows, strip_rows)
    elif m > strip_rows:
        tile_rows = _round_up(m, strip_rows)    # one (possibly partial) block
    else:
        strip_rows = _round_up(m, SUBLANES)     # tiny input: single strip
        tile_rows = strip_rows
    n_strips = tile_rows // strip_rows
    strip_groups = strip_rows // SUBLANES
    unroll_eff = max(1, min(unroll, n_strips))

    total_steps = -(-m // tile_rows)            # cdiv
    n_chunks = 2 if total_steps >= 2 else 1     # megacore split (v7x)
    steps_per_chunk = -(-total_steps // n_chunks)

    def kernel(pred_ref, gt_ref, acc_ref):
        c = pl.program_id(0)
        i = pl.program_id(1)

        @pl.when(i == 0)
        def _():
            acc_ref[...] = jnp.zeros_like(acc_ref)

        step = c * steps_per_chunk + i          # unclamped logical step
        row0 = step * tile_rows

        def strip_body(masked):
            def body(s, carry):
                loss_acc, npos_acc = carry
                r = pl.multiple_of(s * strip_rows, strip_rows)
                p = pred_ref[pl.ds(r, strip_rows), :].astype(jnp.float32)
                g = gt_ref[pl.ds(r, strip_rows), :].astype(jnp.float32)
                if masked:
                    rows = (lax.broadcasted_iota(
                        jnp.int32, (strip_rows, LANES), 0) + (row0 + r))
                    valid = rows < m
                    # Select BEFORE the log so OOB garbage cannot become NaN.
                    p = jnp.where(valid, p, 0.5)
                    g = jnp.where(valid, g, 2.0)
                is_pos = g == 1.0
                neg_inds = (g < 1.0).astype(jnp.float32)
                omg = 1.0 - g
                neg_w = omg * omg
                neg_w = neg_w * neg_w                         # (1 - g)^4
                omp = 1.0 - p
                # One EUP log per element: pos/neg branches are complementary.
                logx = jnp.log(jnp.where(is_pos, p, omp))
                w = jnp.where(is_pos, omp * omp, p * p * neg_w * neg_inds)
                loss = logx * w                               # pos + neg merged
                npos = is_pos.astype(jnp.float32)
                # (strip,128)->(groups,8,128) is layout-free; sum over axis 0
                # is pure elementwise VPU accumulation into 8 vregs.
                loss_acc = loss_acc + loss.reshape(
                    strip_groups, SUBLANES, LANES).sum(axis=0)
                npos_acc = npos_acc + npos.reshape(
                    strip_groups, SUBLANES, LANES).sum(axis=0)
                return loss_acc, npos_acc
            return body

        def run(masked):
            zero = jnp.zeros((SUBLANES, LANES), jnp.float32)
            loss_acc, npos_acc = lax.fori_loop(
                0, n_strips, strip_body(masked), (zero, zero),
                unroll=unroll_eff)
            acc_ref[0:SUBLANES, :] += loss_acc
            acc_ref[SUBLANES:2 * SUBLANES, :] += npos_acc

        # Fast unmasked body for interior tiles; masked body only for the tail
        # (and for clamped over-read steps, which are fully masked -> zero).
        @pl.when(row0 + tile_rows <= m)
        def _():
            run(masked=False)

        @pl.when(row0 + tile_rows > m)
        def _():
            run(masked=True)

    def in_map(c, i):
        # Clamp so steps past the end re-read the last valid block (the kernel
        # masks them fully, so they contribute zero).
        return (jnp.minimum(c * steps_per_chunk + i, total_steps - 1), 0)

    if steps_per_chunk >= 3:
        in_spec = pl.BlockSpec((tile_rows, LANES), in_map,
                               pipeline_mode=pl.Buffered(3))
    else:
        in_spec = pl.BlockSpec((tile_rows, LANES), in_map)
    out_spec = pl.BlockSpec((2 * SUBLANES, LANES), lambda c, i: (c, 0))

    itemsize = pred2d.dtype.itemsize
    cost = pl.CostEstimate(
        flops=18 * n,
        transcendentals=n,
        bytes_accessed=(pred2d.size + gt2d.size) * itemsize
        + n_chunks * 2 * SUBLANES * LANES * 4)

    acc = pl.pallas_call(
        kernel,
        out_shape=jax.ShapeDtypeStruct((n_chunks * 2 * SUBLANES, LANES),
                                       jnp.float32),
        grid_spec=pltpu.PrefetchScalarGridSpec(
            num_scalar_prefetch=0,
            grid=(n_chunks, steps_per_chunk),
            in_specs=[in_spec, in_spec],
            out_specs=out_spec,
        ),
        compiler_params=pltpu.CompilerParams(
            dimension_semantics=("parallel", "arbitrary")),
        cost_estimate=cost,
    )(pred2d, gt2d)

    acc = acc.reshape(n_chunks, 2, SUBLANES, LANES)
    loss_sum = acc[:, 0].sum()     # = pos_loss.sum() + neg_loss.sum()
    num_pos = acc[:, 1].sum()
    # num_pos == 0  =>  pos_loss is identically 0, so -loss_sum == -neg_sum.
    return jnp.where(num_pos == 0.0, -loss_sum, -loss_sum / num_pos)


def _reference(pred, gt):
    pred = pred.astype(jnp.float32)
    gt = gt.astype(jnp.float32)
    pos_inds = (gt == 1.0).astype(jnp.float32)
    neg_inds = (gt < 1.0).astype(jnp.float32)
    neg_weights = (1.0 - gt) ** 4
    pos_loss = jnp.log(pred) * (1.0 - pred) ** 2 * pos_inds
    neg_loss = jnp.log(1.0 - pred) * pred ** 2 * neg_weights * neg_inds
    num_pos = pos_inds.sum()
    return jnp.where(num_pos == 0.0,
                     -neg_loss.sum(),
                     -(pos_loss.sum() + neg_loss.sum()) / num_pos)


def _make_inputs(key, shape, peak_prob):
    k1, k2, k3 = jax.random.split(key, 3)
    pred = jax.nn.sigmoid(jax.random.normal(k1, shape, jnp.float32))
    gt = jax.random.uniform(k2, shape, jnp.float32, 0.0, 0.999)
    if peak_prob > 0.0:
        peaks = jax.random.bernoulli(k3, peak_prob, shape)
        gt = jnp.where(peaks, 1.0, gt)
    return pred, gt


if __name__ == "__main__":
    key = jax.random.PRNGKey(0)
    keys = jax.random.split(key, 6)

    # (shape, peak_prob, extra kwargs) -- exercises the single-tile fast path,
    # the num_pos==0 branch, the masked partial-block tail, the multi-strip
    # fast path, the multi-step pipelined grid, and the clamped over-read step.
    cases = [
        ((2, 4, 16, 16), 0.02, {}),                      # small, single block
        ((2, 4, 16, 16), 0.0, {}),                       # num_pos == 0 branch
        ((2, 5, 32, 32), 0.02, {}),                      # masked partial block
        ((4, 8, 64, 64), 0.02, {}),                      # 16-strip fast path
        ((4, 8, 64, 64), 0.02, {"tile_rows": 128}),      # 2 chunks x 4 steps
        ((4, 8, 64, 64), 0.02, {"tile_rows": 384}),      # odd steps + clamp
    ]

    for k, (shape, peak_prob, kwargs) in zip(keys, cases):
        pred, gt = _make_inputs(k, shape, peak_prob)
        loss = focal_loss(pred, gt, **kwargs)
        jax.block_until_ready(loss)
        ref = _reference(pred, gt)
        assert jnp.allclose(loss, ref, rtol=1e-4, atol=1e-5), (
            shape, kwargs, loss, ref)

    print("KERNEL_OK")
</pallas_src>

<mosaic_0001>
module attributes {stable_mosaic.version = 11 : i64} {
  func.func @kernel(%arg0: i32, %arg1: i32, %arg2: memref<16x128xf32, #tpu.memory_space<vmem>>, %arg3: memref<16x128xf32, #tpu.memory_space<vmem>>, %arg4: memref<16x128xf32, #tpu.memory_space<vmem>>) attributes {dimension_semantics = [#tpu.dimension_semantics<parallel>, #tpu.dimension_semantics<arbitrary>], iteration_bounds = array<i64: 1, 1>, scalar_prefetch = 0 : i64, scratch_operands = 0 : i64, tpu.core_type = #tpu.core_type<tc>, window_params = [{transform_indices = @transform_0, window_bounds = array<i64: 16, 128>}, {transform_indices = @transform_1, window_bounds = array<i64: 16, 128>}, {transform_indices = @transform_2, window_bounds = array<i64: 16, 128>}]} {
    %c0_i32 = arith.constant 0 : i32
    %0 = arith.cmpi eq, %arg1, %c0_i32 : i32
    %1 = arith.extui %0 : i1 to i32
    %c0_i32_0 = arith.constant 0 : i32
    %2 = arith.cmpi ne, %1, %c0_i32_0 : i32
    scf.if %2 {
      %cst = arith.constant 0.000000e+00 : f32
      %14 = vector.broadcast %cst : f32 to vector<16x128xf32>
      %c0 = arith.constant 0 : index
      %c0_7 = arith.constant 0 : index
      %15 = vector.load %arg4[%c0, %c0_7] : memref<16x128xf32, #tpu.memory_space<vmem>>, vector<16x128xf32>
      tpu.vector_store %arg4[%c0, %c0_7], %14 {strides = array<i32>} : memref<16x128xf32, #tpu.memory_space<vmem>>, vector<16x128xf32>,
    } else {
    }
    %c1_i32 = arith.constant 1 : i32
    %3 = arith.muli %arg0, %c1_i32 : i32
    %4 = arith.addi %3, %arg1 : i32
    %c16_i32 = arith.constant 16 : i32
    %5 = arith.muli %4, %c16_i32 : i32
    %c16_i32_1 = arith.constant 16 : i32
    %6 = arith.addi %5, %c16_i32_1 : i32
    %c16_i32_2 = arith.constant 16 : i32
    %7 = arith.cmpi sle, %6, %c16_i32_2 : i32
    %8 = arith.extui %7 : i1 to i32
    %c0_i32_3 = arith.constant 0 : i32
    %9 = arith.cmpi ne, %8, %c0_i32_3 : i32
    scf.if %9 {
      %cst = arith.constant 0.000000e+00 : f32
      %14 = vector.broadcast %cst : f32 to vector<8x128xf32>
      %c0_i32_7 = arith.constant 0 : i32
      %c16_i32_8 = arith.constant 16 : i32
      %15 = arith.muli %c0_i32_7, %c16_i32_8 : i32
      %16 = tpu.assume_multiple %15, 16 : i32
      %17 = arith.index_cast %16 : i32 to index
      %c0 = arith.constant 0 : index
      %18 = vector.load %arg2[%17, %c0] : memref<16x128xf32, #tpu.memory_space<vmem>>, vector<16x128xf32>
      %19 = arith.index_cast %16 : i32 to index
      %c0_9 = arith.constant 0 : index
      %20 = vector.load %arg3[%19, %c0_9] : memref<16x128xf32, #tpu.memory_space<vmem>>, vector<16x128xf32>
      %cst_10 = arith.constant 1.000000e+00 : f32
      %21 = vector.broadcast %cst_10 : f32 to vector<16x128xf32>
      %22 = arith.cmpf oeq, %20, %21 : vector<16x128xf32>
      %cst_11 = arith.constant 1.000000e+00 : f32
      %23 = vector.broadcast %cst_11 : f32 to vector<16x128xf32>
      %24 = arith.cmpf olt, %20, %23 : vector<16x128xf32>
      %25 = arith.extui %24 : vector<16x128xi1> to vector<16x128xi32>
      %26 = arith.sitofp %25 : vector<16x128xi32> to vector<16x128xf32>
      %cst_12 = arith.constant 1.000000e+00 : f32
      %27 = vector.broadcast %cst_12 : f32 to vector<16x128xf32>
      %28 = arith.subf %27, %20 : vector<16x128xf32>
      %29 = arith.mulf %28, %28 : vector<16x128xf32>
      %30 = arith.mulf %29, %29 : vector<16x128xf32>
      %cst_13 = arith.constant 1.000000e+00 : f32
      %31 = vector.broadcast %cst_13 : f32 to vector<16x128xf32>
      %32 = arith.subf %31, %18 : vector<16x128xf32>
      %33 = arith.select %22, %18, %32 : vector<16x128xi1>, vector<16x128xf32>
      %34 = math.log %33 : vector<16x128xf32>
      %35 = arith.mulf %32, %32 : vector<16x128xf32>
      %36 = arith.mulf %18, %18 : vector<16x128xf32>
      %37 = arith.mulf %36, %30 : vector<16x128xf32>
      %38 = arith.mulf %37, %26 : vector<16x128xf32>
      %39 = arith.select %22, %35, %38 : vector<16x128xi1>, vector<16x128xf32>
      %40 = arith.mulf %34, %39 : vector<16x128xf32>
      %41 = arith.extui %22 : vector<16x128xi1> to vector<16x128xi32>
      %42 = arith.sitofp %41 : vector<16x128xi32> to vector<16x128xf32>
      %43 = vector.shape_cast %40 : vector<16x128xf32> to vector<2x8x128xf32>
      %cst_14 = arith.constant dense<0.000000e+00> : vector<8x128xf32>
      %44 = vector.multi_reduction <add>, %43, %cst_14 [0] : vector<2x8x128xf32> to vector<8x128xf32>
      %45 = arith.addf %14, %44 : vector<8x128xf32>
      %46 = vector.shape_cast %42 : vector<16x128xf32> to vector<2x8x128xf32>
      %cst_15 = arith.constant dense<0.000000e+00> : vector<8x128xf32>
      %47 = vector.multi_reduction <add>, %46, %cst_15 [0] : vector<2x8x128xf32> to vector<8x128xf32>
      %48 = arith.addf %14, %47 : vector<8x128xf32>
      %c1_i32_16 = arith.constant 1 : i32
      %c0_17 = arith.constant 0 : index
      %c0_18 = arith.constant 0 : index
      %49 = vector.load %arg4[%c0_17, %c0_18] : memref<16x128xf32, #tpu.memory_space<vmem>>, vector<8x128xf32>
      %50 = arith.addf %49, %45 : vector<8x128xf32>
      %c0_19 = arith.constant 0 : index
      %c0_20 = arith.constant 0 : index
      %51 = vector.load %arg4[%c0_19, %c0_20] : memref<16x128xf32, #tpu.memory_space<vmem>>, vector<8x128xf32>
      tpu.vector_store %arg4[%c0_19, %c0_20], %50 {strides = array<i32>} : memref<16x128xf32, #tpu.memory_space<vmem>>, vector<8x128xf32>,
      %c8 = arith.constant 8 : index
      %c0_21 = arith.constant 0 : index
      %52 = vector.load %arg4[%c8, %c0_21] : memref<16x128xf32, #tpu.memory_space<vmem>>, vector<8x128xf32>
      %53 = arith.addf %52, %48 : vector<8x128xf32>
      %c8_22 = arith.constant 8 : index
      %c0_23 = arith.constant 0 : index
      %54 = vector.load %arg4[%c8_22, %c0_23] : memref<16x128xf32, #tpu.memory_space<vmem>>, vector<8x128xf32>
      tpu.vector_store %arg4[%c8_22, %c0_23], %53 {strides = array<i32>} : memref<16x128xf32, #tpu.memory_space<vmem>>, vector<8x128xf32>,
    } else {
    }
    %c16_i32_4 = arith.constant 16 : i32
    %10 = arith.addi %5, %c16_i32_4 : i32
    %c16_i32_5 = arith.constant 16 : i32
    %11 = arith.cmpi sgt, %10, %c16_i32_5 : i32
    %12 = arith.extui %11 : i1 to i32
    %c0_i32_6 = arith.constant 0 : i32
    %13 = arith.cmpi ne, %12, %c0_i32_6 : i32
    scf.if %13 {
      %cst = arith.constant 0.000000e+00 : f32
      %14 = vector.broadcast %cst : f32 to vector<8x128xf32>
      %c0_i32_7 = arith.constant 0 : i32
      %c16_i32_8 = arith.constant 16 : i32
      %15 = arith.muli %c0_i32_7, %c16_i32_8 : i32
      %16 = tpu.assume_multiple %15, 16 : i32
      %17 = arith.index_cast %16 : i32 to index
      %c0 = arith.constant 0 : index
      %18 = vector.load %arg2[%17, %c0] : memref<16x128xf32, #tpu.memory_space<vmem>>, vector<16x128xf32>
      %19 = arith.index_cast %16 : i32 to index
      %c0_9 = arith.constant 0 : index
      %20 = vector.load %arg3[%19, %c0_9] : memref<16x128xf32, #tpu.memory_space<vmem>>, vector<16x128xf32>
      %21 = tpu.iota {dimensions = array<i32: 0>} : vector<16x128xi32>
      %22 = arith.addi %5, %16 : i32
      %23 = vector.broadcast %22 : i32 to vector<16x128xi32>
      %24 = arith.addi %21, %23 : vector<16x128xi32>
      %c16_i32_10 = arith.constant 16 : i32
      %25 = vector.broadcast %c16_i32_10 : i32 to vector<16x128xi32>
      %26 = arith.cmpi slt, %24, %25 : vector<16x128xi32>
      %cst_11 = arith.constant 5.000000e-01 : f32
      %27 = vector.broadcast %cst_11 : f32 to vector<16x128xf32>
      %28 = arith.select %26, %18, %27 : vector<16x128xi1>, vector<16x128xf32>
      %cst_12 = arith.constant 2.000000e+00 : f32
      %29 = vector.broadcast %cst_12 : f32 to vector<16x128xf32>
      %30 = arith.select %26, %20, %29 : vector<16x128xi1>, vector<16x128xf32>
      %cst_13 = arith.constant 1.000000e+00 : f32
      %31 = vector.broadcast %cst_13 : f32 to vector<16x128xf32>
      %32 = arith.cmpf oeq, %30, %31 : vector<16x128xf32>
      %cst_14 = arith.constant 1.000000e+00 : f32
      %33 = vector.broadcast %cst_14 : f32 to vector<16x128xf32>
      %34 = arith.cmpf olt, %30, %33 : vector<16x128xf32>
      %35 = arith.extui %34 : vector<16x128xi1> to vector<16x128xi32>
      %36 = arith.sitofp %35 : vector<16x128xi32> to vector<16x128xf32>
      %cst_15 = arith.constant 1.000000e+00 : f32
      %37 = vector.broadcast %cst_15 : f32 to vector<16x128xf32>
      %38 = arith.subf %37, %30 : vector<16x128xf32>
      %39 = arith.mulf %38, %38 : vector<16x128xf32>
      %40 = arith.mulf %39, %39 : vector<16x128xf32>
      %cst_16 = arith.constant 1.000000e+00 : f32
      %41 = vector.broadcast %cst_16 : f32 to vector<16x128xf32>
      %42 = arith.subf %41, %28 : vector<16x128xf32>
      %43 = arith.select %32, %28, %42 : vector<16x128xi1>, vector<16x128xf32>
      %44 = math.log %43 : vector<16x128xf32>
      %45 = arith.mulf %42, %42 : vector<16x128xf32>
      %46 = arith.mulf %28, %28 : vector<16x128xf32>
      %47 = arith.mulf %46, %40 : vector<16x128xf32>
      %48 = arith.mulf %47, %36 : vector<16x128xf32>
      %49 = arith.select %32, %45, %48 : vector<16x128xi1>, vector<16x128xf32>
      %50 = arith.mulf %44, %49 : vector<16x128xf32>
      %51 = arith.extui %32 : vector<16x128xi1> to vector<16x128xi32>
      %52 = arith.sitofp %51 : vector<16x128xi32> to vector<16x128xf32>
      %53 = vector.shape_cast %50 : vector<16x128xf32> to vector<2x8x128xf32>
      %cst_17 = arith.constant dense<0.000000e+00> : vector<8x128xf32>
      %54 = vector.multi_reduction <add>, %53, %cst_17 [0] : vector<2x8x128xf32> to vector<8x128xf32>
      %55 = arith.addf %14, %54 : vector<8x128xf32>
      %56 = vector.shape_cast %52 : vector<16x128xf32> to vector<2x8x128xf32>
      %cst_18 = arith.constant dense<0.000000e+00> : vector<8x128xf32>
      %57 = vector.multi_reduction <add>, %56, %cst_18 [0] : vector<2x8x128xf32> to vector<8x128xf32>
      %58 = arith.addf %14, %57 : vector<8x128xf32>
      %c1_i32_19 = arith.constant 1 : i32
      %c0_20 = arith.constant 0 : index
      %c0_21 = arith.constant 0 : index
      %59 = vector.load %arg4[%c0_20, %c0_21] : memref<16x128xf32, #tpu.memory_space<vmem>>, vector<8x128xf32>
      %60 = arith.addf %59, %55 : vector<8x128xf32>
      %c0_22 = arith.constant 0 : index
      %c0_23 = arith.constant 0 : index
      %61 = vector.load %arg4[%c0_22, %c0_23] : memref<16x128xf32, #tpu.memory_space<vmem>>, vector<8x128xf32>
      tpu.vector_store %arg4[%c0_22, %c0_23], %60 {strides = array<i32>} : memref<16x128xf32, #tpu.memory_space<vmem>>, vector<8x128xf32>,
      %c8 = arith.constant 8 : index
      %c0_24 = arith.constant 0 : index
      %62 = vector.load %arg4[%c8, %c0_24] : memref<16x128xf32, #tpu.memory_space<vmem>>, vector<8x128xf32>
      %63 = arith.addf %62, %58 : vector<8x128xf32>
      %c8_25 = arith.constant 8 : index
      %c0_26 = arith.constant 0 : index
      %64 = vector.load %arg4[%c8_25, %c0_26] : memref<16x128xf32, #tpu.memory_space<vmem>>, vector<8x128xf32>
      tpu.vector_store %arg4[%c8_25, %c0_26], %63 {strides = array<i32>} : memref<16x128xf32, #tpu.memory_space<vmem>>, vector<8x128xf32>,
    } else {
    }
    return
  }
  func.func @transform_0(%arg0: i32, %arg1: i32) -> (i32, i32) {
    %c1_i32 = arith.constant 1 : i32
    %0 = arith.muli %arg0, %c1_i32 : i32
    %1 = arith.addi %0, %arg1 : i32
    %c0_i32 = arith.constant 0 : i32
    %2 = arith.minsi %1, %c0_i32 : i32
    %c0_i32_0 = arith.constant 0 : i32
    %c0_i32_1 = arith.constant 0 : i32
    return %2, %c0_i32_0 : i32, i32
  }
  func.func @transform_1(%arg0: i32, %arg1: i32) -> (i32, i32) {
    %c1_i32 = arith.constant 1 : i32
    %0 = arith.muli %arg0, %c1_i32 : i32
    %1 = arith.addi %0, %arg1 : i32
    %c0_i32 = arith.constant 0 : i32
    %2 = arith.minsi %1, %c0_i32 : i32
    %c0_i32_0 = arith.constant 0 : i32
    %c0_i32_1 = arith.constant 0 : i32
    return %2, %c0_i32_0 : i32, i32
  }
  func.func @transform_2(%arg0: i32, %arg1: i32) -> (i32, i32) {
    %c0_i32 = arith.constant 0 : i32
    %c0_i32_0 = arith.constant 0 : i32
    return %arg0, %c0_i32 : i32, i32
  }
}

</mosaic_0001>

<llo_original>
// kernel: tpu_custom_call.1
$region0: #{tpu_custom_call.1}
  #allocation0 [shape = 'u32[]', space=smem, size = 0x4, offset = 0x4, fixed_abs, tag = 'smem constant byte address 0x4 - core index']
  #allocation1 [shape = 'u32[72,128]{1,0:T(1,128)}', space=vmem, size = 0x9000, scoped, tag = 'internal scratch']
  %s0 = inlined_call_operand.hbm [shape: f32[16,128], index: 0, kind: input, shape index: {}]
  %s1 = inlined_call_operand.hbm [shape: f32[16,128], index: 1, kind: input, shape index: {}]
  %s2 = inlined_call_operand.hbm [shape: f32[16,128], index: 2, kind: output, shape index: {}]
  %s3 = sld [smem:[#allocation0]]
  $region38: #{tpu_custom_call.1} parent=0
    _
  %s5 = ssub.s32 1, %s3
  %s6 = scalar_select 0, %s5, %s3
  $region1: #{tpu_custom_call.1} parent=0
    #allocation2 [shape = 'u8[8192]{0}', space=vmem, size = 0x2000, scoped, tag = 'input window, operand 0, single buffered']
    #allocation3 [shape = 's32[1]{0}', space=sflag, size = 0x4, scoped, tag = 'scoped memory for tpu_custom_call.1']
    #allocation4 [shape = 's32[1]{0}', space=sflag, size = 0x4, scoped, tag = 'scoped memory for tpu_custom_call.1']
    #allocation5 [shape = 'u8[8192]{0}', space=vmem, size = 0x2000, scoped, tag = 'input window, operand 1, single buffered']
    #allocation6 [shape = 's32[1]{0}', space=sflag, size = 0x4, scoped, tag = 'scoped memory for tpu_custom_call.1']
    #allocation7 [shape = 'u8[8192]{0}', space=vmem, size = 0x2000, scoped, tag = 'output window, operand 0, single buffered']
    %7 = vsyncpa [#allocation3], 0
    %8 = vsyncpa [#allocation6], 0
    %9 = vsyncpa [#allocation4], 0
    // Predicated region
    $region2: #{tpu_custom_call.1} parent=1 // pred_check
      _
    $region3: #{tpu_custom_call.1} parent=1 // pred_check_branch
      %11 = sbr.rel (0) target = $region5
    $region4: #{tpu_custom_call.1} parent=1 // pred_region
      %s12 = sadd.s32 0, 0
      %p13 = scmp.lt.s32.totalorder %s12, 0
      %s14 = scalar_select %p13, %s12, 0
      %s15 = smul.u32 2, %s14
      %17 = vsyncadd [#allocation3], 0
      %s18 = smul.addr %s15, 8
      %s19 = scalar_lea.hbm %s0, %s18
      %s20 = sshll.u32 %s19, 4
      %s21 = int_to_ptr.hbm [resolvable:$true] %s20
      %s22 = sshll.u32 [#allocation2], 4
      %s23 = int_to_ptr.vmem [resolvable:$true] %s22
      %28 = dma.hbm_to_vmem [thread:$0]  %s21, 256, %s23, [#allocation3], 128, 128, 8
    $region5: #{tpu_custom_call.1} parent=1 // pred_fallthru
      _
    // Predicated region
    $region6: #{tpu_custom_call.1} parent=1 // pred_check
      _
    $region7: #{tpu_custom_call.1} parent=1 // pred_check_branch
      %30 = sbr.rel (0) target = $region9
    $region8: #{tpu_custom_call.1} parent=1 // pred_region
      %s31 = sadd.s32 0, 0
      %p32 = scmp.lt.s32.totalorder %s31, 0
      %s33 = scalar_select %p32, %s31, 0
      %s34 = smul.u32 2, %s33
      %36 = vsyncadd [#allocation6], 0
      %s37 = smul.addr %s34, 8
      %s38 = scalar_lea.hbm %s1, %s37
      %s39 = sshll.u32 %s38, 4
      %s40 = int_to_ptr.hbm [resolvable:$true] %s39
      %s41 = sshll.u32 [#allocation5], 4
      %s42 = int_to_ptr.vmem [resolvable:$true] %s41
      %47 = dma.hbm_to_vmem [thread:$0]  %s40, 256, %s42, [#allocation6], 128, 128, 8
    $region9: #{tpu_custom_call.1} parent=1 // pred_fallthru
      _
    // Predicated region
    $region10: #{tpu_custom_call.1} parent=1 // pred_check
      _
    $region11: #{tpu_custom_call.1} parent=1 // pred_check_branch
      %49 = sbr.rel (0) target = $region13
    $region12: #{tpu_custom_call.1} parent=1 // pred_region
      %51 = dma.done [#allocation3], 256
    $region13: #{tpu_custom_call.1} parent=1 // pred_fallthru
      _
    // Predicated region
    $region14: #{tpu_custom_call.1} parent=1 // pred_check
      _
    $region15: #{tpu_custom_call.1} parent=1 // pred_check_branch
      %53 = sbr.rel (0) target = $region17
    $region16: #{tpu_custom_call.1} parent=1 // pred_region
      %55 = dma.done [#allocation6], 256
    $region17: #{tpu_custom_call.1} parent=1 // pred_fallthru
      _
    %s56 = sadd.s32 0, 0
    %p57 = scmp.lt.s32.totalorder %s56, 0
    %s58 = scalar_select %p57, %s56, 0
    %s59 = smul.u32 2, %s58
    %s60 = sadd.s32 0, 0
    %p61 = scmp.lt.s32.totalorder %s60, 0
    %s62 = scalar_select %p61, %s60, 0
    %s63 = smul.u32 2, %s62
    %p64 = scmp.eq.s32.totalorder 0, 0
    // Predicated region
    $region18: #{tpu_custom_call.1} parent=1 // pred_check
      %p65 = pneg %p64
    $region19: #{tpu_custom_call.1} parent=1 // pred_check_branch
      %67 = sbr.rel (%p65) target = $region21
    $region20: #{tpu_custom_call.1} parent=1 // pred_region
      %68 = vst [vmem:[#allocation7] sm:$0xff] 0.0
      %69 = vst [vmem:[#allocation7 + $0x8] sm:$0xff] 0.0
    $region21: #{tpu_custom_call.1} parent=1 // pred_fallthru
      _
    %s70 = sadd.s32 0, 0
    %s71 = smul.u32 %s70, 16
    %s72 = sadd.s32 %s71, 16
    %p73 = scmp.le.s32.totalorder %s72, 16
    // Predicated region
    $region22: #{tpu_custom_call.1} parent=1 // pred_check
      %p74 = pneg %p73
    $region23: #{tpu_custom_call.1} parent=1 // pred_check_branch
      %76 = sbr.rel (%p74) target = $region25
    $region24: #{tpu_custom_call.1} parent=1 // pred_region
      %v77 = vld [vmem:[#allocation2] sm:$0xff]
      %v78 = vld [vmem:[#allocation2 + $0x8] sm:$0xff]
      %v79 = vld [vmem:[#allocation5] sm:$0xff]
      %v80 = vld [vmem:[#allocation5 + $0x8] sm:$0xff]
      %vm81 = vcmp.eq.f32.partialorder %v79, 1.0
      %vm82 = vcmp.eq.f32.partialorder %v80, 1.0
      %vm83 = vcmp.lt.f32.partialorder %v79, 1.0
      %vm84 = vcmp.lt.f32.partialorder %v80, 1.0
      %v85 = vsel %vm83, 1, 0
      %v86 = vsel %vm84, 1, 0
      %v87 = vcvt.s32.f32 %v85
      %v88 = vcvt.s32.f32 %v86
      %v89 = vsub.f32 1.0, %v79
      %v90 = vsub.f32 1.0, %v80
      %v91 = vmul.f32 %v89, %v89
      %v92 = vmul.f32 %v90, %v90
      %v93 = vmul.f32 %v91, %v91
      %v94 = vmul.f32 %v92, %v92
      %v95 = vsub.f32 1.0, %v77
      %v96 = vsub.f32 1.0, %v78
      %v97 = vsel %vm81, %v77, %v95
      %v98 = vsel %vm82, %v78, %v96
      %v99 = vlog2.pop %v97
      %v100 = vmul.f32 %v99, 0.6931472
      %v101 = vlog2.pop %v98
      %v102 = vmul.f32 %v101, 0.6931472
      %v103 = vmul.f32 %v95, %v95
      %v104 = vmul.f32 %v96, %v96
      %v105 = vmul.f32 %v77, %v77
      %v106 = vmul.f32 %v78, %v78
      %v107 = vmul.f32 %v105, %v93
      %v108 = vmul.f32 %v106, %v94
      %v109 = vmul.f32 %v107, %v87
      %v110 = vmul.f32 %v108, %v88
      %v111 = vsel %vm81, %v103, %v109
      %v112 = vsel %vm82, %v104, %v110
      %v113 = vmul.f32 %v100, %v111
      %v114 = vmul.f32 %v102, %v112
      %v115 = vsel %vm81, 1, 0
      %v116 = vsel %vm82, 1, 0
      %v117 = vcvt.s32.f32 %v115
      %v118 = vcvt.s32.f32 %v116
      %v119 = vadd.f32 %v113, %v114
      %v120 = vadd.f32 %v119, 0.0
      %v121 = vadd.f32 %v117, %v118
      %v122 = vadd.f32 %v121, 0.0
      %v123 = vld [vmem:[#allocation7] sm:$0xff]
      %v124 = vadd.f32 %v123, %v120
      %125 = vst [vmem:[#allocation7] sm:$0xff] %v124
      %v126 = vld [vmem:[#allocation7 + $0x8] sm:$0xff]
      %v127 = vadd.f32 %v126, %v122
      %128 = vst [vmem:[#allocation7 + $0x8] sm:$0xff] %v127
    $region25: #{tpu_custom_call.1} parent=1 // pred_fallthru
      _
    %p129 = scmp.gt.s32.totalorder %s72, 16
    // Predicated region
    $region26: #{tpu_custom_call.1} parent=1 // pred_check
      %p130 = pneg %p129
    $region27: #{tpu_custom_call.1} parent=1 // pred_check_branch
      %132 = sbr.rel (%p130) target = $region29
    $region28: #{tpu_custom_call.1} parent=1 // pred_region
      %v133 = vld [vmem:[#allocation2] sm:$0xff]
      %v134 = vld [vmem:[#allocation2 + $0x8] sm:$0xff]
      %v135 = vld [vmem:[#allocation5] sm:$0xff]
      %v136 = vld [vmem:[#allocation5 + $0x8] sm:$0xff]
      %v137 = vlaneseq
      %v138 = vshrl.u32 %v137, 7
      %v139 = vadd.s32 %v138, 8
      %s140 = sadd.s32 %s71, 0
      %v141 = vstv %s140
      %v142 = vadd.s32 %v138, %v141
      %v143 = vadd.s32 %v139, %v141
      %vm144 = vcmp.lt.s32.totalorder %v142, 16
      %vm145 = vcmp.lt.s32.totalorder %v143, 16
      %v146 = vsel %vm144, %v133, 0.5
      %v147 = vsel %vm145, %v134, 0.5
      %v148 = vsel %vm144, %v135, 2.0
      %v149 = vsel %vm145, %v136, 2.0
      %vm150 = vcmp.eq.f32.partialorder %v148, 1.0
      %vm151 = vcmp.eq.f32.partialorder %v149, 1.0
      %vm152 = vcmp.lt.f32.partialorder %v148, 1.0
      %vm153 = vcmp.lt.f32.partialorder %v149, 1.0
      %v154 = vsel %vm152, 1, 0
      %v155 = vsel %vm153, 1, 0
      %v156 = vcvt.s32.f32 %v154
      %v157 = vcvt.s32.f32 %v155
      %v158 = vsub.f32 1.0, %v148
      %v159 = vsub.f32 1.0, %v149
      %v160 = vmul.f32 %v158, %v158
      %v161 = vmul.f32 %v159, %v159
      %v162 = vmul.f32 %v160, %v160
      %v163 = vmul.f32 %v161, %v161
      %v164 = vsub.f32 1.0, %v146
      %v165 = vsub.f32 1.0, %v147
      %v166 = vsel %vm150, %v146, %v164
      %v167 = vsel %vm151, %v147, %v165
      %v168 = vlog2.pop %v166
      %v169 = vmul.f32 %v168, 0.6931472
      %v170 = vlog2.pop %v167
      %v171 = vmul.f32 %v170, 0.6931472
      %v172 = vmul.f32 %v164, %v164
      %v173 = vmul.f32 %v165, %v165
      %v174 = vmul.f32 %v146, %v146
      %v175 = vmul.f32 %v147, %v147
      %v176 = vmul.f32 %v174, %v162
      %v177 = vmul.f32 %v175, %v163
      %v178 = vmul.f32 %v176, %v156
      %v179 = vmul.f32 %v177, %v157
      %v180 = vsel %vm150, %v172, %v178
      %v181 = vsel %vm151, %v173, %v179
      %v182 = vmul.f32 %v169, %v180
      %v183 = vmul.f32 %v171, %v181
      %v184 = vsel %vm150, 1, 0
      %v185 = vsel %vm151, 1, 0
      %v186 = vcvt.s32.f32 %v184
      %v187 = vcvt.s32.f32 %v185
      %v188 = vadd.f32 %v182, %v183
      %v189 = vadd.f32 %v188, 0.0
      %v190 = vadd.f32 %v186, %v187
      %v191 = vadd.f32 %v190, 0.0
      %v192 = vld [vmem:[#allocation7] sm:$0xff]
      %v193 = vadd.f32 %v192, %v189
      %194 = vst [vmem:[#allocation7] sm:$0xff] %v193
      %v195 = vld [vmem:[#allocation7 + $0x8] sm:$0xff]
      %v196 = vadd.f32 %v195, %v191
      %197 = vst [vmem:[#allocation7 + $0x8] sm:$0xff] %v196
    $region29: #{tpu_custom_call.1} parent=1 // pred_fallthru
      _
    // Predicated region
    $region30: #{tpu_custom_call.1} parent=1 // pred_check
      _
    $region31: #{tpu_custom_call.1} parent=1 // pred_check_branch
      %199 = sbr.rel (0) target = $region33
    $region32: #{tpu_custom_call.1} parent=1 // pred_region
      %201 = vsyncadd [#allocation4], 0
      %s202 = sshll.u32 [#allocation7], 4
      %s203 = int_to_ptr.vmem [resolvable:$true] %s202
      %s204 = sshll.u32 %s2, 4
      %s205 = int_to_ptr.hbm [resolvable:$true] %s204
      %210 = dma.vmem_to_hbm [thread:$0]  %s203, 256, %s205, [#allocation4], 128, 128, 8
    $region33: #{tpu_custom_call.1} parent=1 // pred_fallthru
      _
    // Predicated region
    $region34: #{tpu_custom_call.1} parent=1 // pred_check
      _
    $region35: #{tpu_custom_call.1} parent=1 // pred_check_branch
      %212 = sbr.rel (0) target = $region37
    $region36: #{tpu_custom_call.1} parent=1 // pred_region
      %214 = dma.done [#allocation4], 256
    $region37: #{tpu_custom_call.1} parent=1 // pred_fallthru
      _
    %215 = vsyncpa [#allocation3], 1
    %216 = vsyncpa [#allocation6], 1
    %217 = vsyncpa [#allocation4], 1

</llo_original>
